<compile_context>
chip_gen: v5e
topology: v5e:2x2
jax: 0.10.0
libtpu: 0.0.40
codegen_flags: <defaults>
</compile_context>

<pallas_src>
import jax
import jax.numpy as jnp
from jax.experimental import pallas as pl
from jax.experimental.pallas import tpu as pltpu


# --------------------------------------------------------------------------
# Conv path: Conv2d(Cin, Cout, kernel=3, stride=2, padding=1)
# --------------------------------------------------------------------------
def _conv_kernel(body_ref, edge_ref, w_ref, b_ref, o_ref, acc_ref):
    # body_ref: (1, TH, 2, Wq, 2*Cin)   padded rows 2*u+v for u in this row tile
    # edge_ref: (1, 1,  2, Wq, 2*Cin)   halo row u = (t+1)*TH (only v=0 is used)
    # w_ref:    (3, 2, 2*Cin, Cout)     per kh: [w(kh,0); w(kh,1)] and [w(kh,2); 0]
    # b_ref:    (1, Cout)
    # o_ref:    (1, TH, Wo, Cout)
    # acc_ref:  VMEM (TH*Wo, Cout) f32 scratch accumulator
    TH = o_ref.shape[1]
    Wo = o_ref.shape[2]
    Cout = o_ref.shape[3]
    C2 = body_ref.shape[4]          # 2 * Cin (W-pair folded into lanes)
    M = TH * Wo

    def tap(rows, w_a, w_b):
        # rows: (nr, Wq, 2*Cin) -> partial conv output (nr*Wo, Cout), f32
        nr = rows.shape[0]
        a = rows[:, 0:Wo, :].reshape(nr * Wo, C2)        # taps kw=0,1 (K=2*Cin)
        # offset-1 sublane window feeds the kw==2 tap; the small relayout copy
        # hides under the DMA in this mem-bound op.
        c = rows[:, 1:Wo + 1, :].reshape(nr * Wo, C2)
        return (jnp.dot(a, w_a, preferred_element_type=jnp.float32)
                + jnp.dot(c, w_b, preferred_element_type=jnp.float32))

    xb = body_ref[0]                                      # (TH, 2, Wq, 2*Cin)

    # init accumulator with the broadcast bias (saves one VPU pass later)
    acc_ref[...] = jnp.broadcast_to(b_ref[...].astype(jnp.float32), (M, Cout))
    acc_ref[...] += tap(xb[:, 0], w_ref[0, 0], w_ref[0, 1])        # kh = 0
    acc_ref[...] += tap(xb[:, 1], w_ref[1, 0], w_ref[1, 1])        # kh = 1
    if TH > 1:                                                     # kh = 2 (body)
        acc_ref[0:(TH - 1) * Wo, :] += tap(xb[1:, 0], w_ref[2, 0], w_ref[2, 1])
    acc_ref[(TH - 1) * Wo:M, :] += tap(edge_ref[0, :, 0],          # kh = 2 (halo)
                                       w_ref[2, 0], w_ref[2, 1])

    o_ref[0] = acc_ref[...].reshape(TH, Wo, Cout).astype(o_ref.dtype)


@jax.jit
def downsample_conv2d(x_nchw, w_oihw, bias):
    B, Cin, H, W = x_nchw.shape
    Cout = w_oihw.shape[0]
    Ho = (H - 1) // 2 + 1
    Wo = (W - 1) // 2 + 1
    Wq = Wo + 1
    C2 = 2 * Cin

    # ---- output-row tile size: keep the body block a few MiB, >=2 tiles ----
    itemsize = x_nchw.dtype.itemsize
    bytes_per_out_row = 2 * Wq * C2 * itemsize          # one u-slot of the body block
    TH = max(1, min(Ho, (2 * 1024 * 1024) // max(1, bytes_per_out_row)))
    if TH >= Ho and Ho >= 2:
        TH = (Ho + 1) // 2                              # pipelining / megacore at B=1
    n_t = (Ho + TH - 1) // TH
    Ho_p = n_t * TH                                     # output rows padded to the tile

    # ---- single layout pass: NCHW -> NHWC + zero pad; the rest is free ----
    xt = jnp.transpose(x_nchw, (0, 2, 3, 1))            # (B, H, W, Cin)
    xp = jnp.pad(xt, ((0, 0),
                      (1, 2 * Ho_p + 1 - H),            # conv pad + row-tile pad
                      (1, 2 * Wo + 1 - W),              # conv pad (+1 for odd W)
                      (0, 0)))                          # (B, 2*Ho_p+2, 2*Wq, Cin)
    # free reshape: row parity -> leading axis, W-pairs -> lane dim (2*Cin lanes)
    xp = xp.reshape(B, Ho_p + 1, 2, Wq, C2)

    # ---- pack weights: per kh, [w(kh,0); w(kh,1)] and [w(kh,2); 0] over K ----
    w_hwio = jnp.transpose(w_oihw, (2, 3, 1, 0)).astype(x_nchw.dtype)   # (3,3,Cin,Cout)
    w_a = jnp.concatenate([w_hwio[:, 0], w_hwio[:, 1]], axis=1)         # (3, 2Cin, Cout)
    w_b = jnp.concatenate([w_hwio[:, 2], jnp.zeros_like(w_hwio[:, 2])], axis=1)
    w_packed = jnp.stack([w_a, w_b], axis=1)                            # (3, 2, 2Cin, Cout)
    b2d = bias.reshape(1, Cout).astype(x_nchw.dtype)

    out = pl.pallas_call(
        _conv_kernel,
        out_shape=jax.ShapeDtypeStruct((B, Ho_p, Wo, Cout), x_nchw.dtype),
        grid=(B, n_t),
        in_specs=[
            pl.BlockSpec((1, TH, 2, Wq, C2), lambda b, t: (b, t, 0, 0, 0)),
            pl.BlockSpec((1, 1, 2, Wq, C2),
                         lambda b, t: (b, (t + 1) * TH, 0, 0, 0)),      # halo row
            pl.BlockSpec((3, 2, C2, Cout), lambda b, t: (0, 0, 0, 0)),
            pl.BlockSpec((1, Cout), lambda b, t: (0, 0)),
        ],
        out_specs=pl.BlockSpec((1, TH, Wo, Cout), lambda b, t: (b, t, 0, 0)),
        scratch_shapes=[pltpu.VMEM((TH * Wo, Cout), jnp.float32)],
        compiler_params=pltpu.CompilerParams(
            dimension_semantics=("parallel", "parallel"),
            vmem_limit_bytes=48 * 1024 * 1024),
    )(xp, xp, w_packed, b2d)

    out = out[:, :Ho]                                   # drop row-tile padding (no-op usually)
    return jnp.transpose(out, (0, 3, 1, 2))             # back to NCHW


# --------------------------------------------------------------------------
# Pool path: AvgPool2d(kernel_size=2, stride=2)  (reads/writes NCHW directly)
# --------------------------------------------------------------------------
def _pool_kernel(x_ref, s_ref, o_ref):
    # x_ref: (1, TC, Ho, 2*W2) rows 2*oh and 2*oh+1 folded onto the lane dim
    # s_ref: (2*W2, Wo) 0.25-valued selection matrix -> 2x2 mean as one matmul
    # o_ref: (1, TC, Ho, Wo)
    TC, Ho, L = x_ref.shape[1], x_ref.shape[2], x_ref.shape[3]
    Wo = o_ref.shape[3]
    x = x_ref[0].reshape(TC * Ho, L)
    y = jnp.dot(x, s_ref[...], preferred_element_type=jnp.float32)
    o_ref[0] = y.reshape(TC, Ho, Wo).astype(o_ref.dtype)


def _largest_divisor_leq(n, cap):
    cap = int(max(1, min(n, cap)))
    for d in range(cap, 0, -1):
        if n % d == 0:
            return d
    return 1


@jax.jit
def downsample_avgpool2d(x_nchw):
    B, C, H, W = x_nchw.shape
    Ho, Wo = H // 2, W // 2
    x = x_nchw[:, :, :2 * Ho, :2 * Wo]                  # crop odd remainder (torch semantics)
    W2 = 2 * Wo
    xr = x.reshape(B, C, Ho, 2 * W2)                    # free reshape: row pair -> lanes

    j = jnp.arange(2 * W2)[:, None]
    ow = jnp.arange(Wo)[None, :]
    sel = ((j == 2 * ow) | (j == 2 * ow + 1) |
           (j == W2 + 2 * ow) | (j == W2 + 2 * ow + 1))
    s2 = (0.25 * sel).astype(x_nchw.dtype)              # (2*W2, Wo), f32 accumulate in MXU

    row_bytes = Ho * 2 * W2 * x_nchw.dtype.itemsize     # per-channel block bytes
    TC = _largest_divisor_leq(C, max(1, (1024 * 1024) // max(1, row_bytes)))
    if B == 1 and TC >= C and C >= 2:
        TC = _largest_divisor_leq(C, max(1, C // 2))    # feed both cores at B=1
    n_c = C // TC

    return pl.pallas_call(
        _pool_kernel,
        out_shape=jax.ShapeDtypeStruct((B, C, Ho, Wo), x_nchw.dtype),
        grid=(B, n_c),
        in_specs=[
            pl.BlockSpec((1, TC, Ho, 2 * W2), lambda b, c: (b, c, 0, 0)),
            pl.BlockSpec((2 * W2, Wo), lambda b, c: (0, 0)),
        ],
        out_specs=pl.BlockSpec((1, TC, Ho, Wo), lambda b, c: (b, c, 0, 0)),
        compiler_params=pltpu.CompilerParams(
            dimension_semantics=("parallel", "parallel"),
            vmem_limit_bytes=48 * 1024 * 1024),
    )(xr, s2)


# --------------------------------------------------------------------------
# Module mirror
# --------------------------------------------------------------------------
class Downsample:
    def __init__(self, channels, use_conv, dims=2, out_channels=None,
                 key=jax.random.PRNGKey(42)):
        # TODO(synk): dims=1 / dims=3 variants (conv_nd/avg_pool_nd) not implemented.
        assert dims == 2, "only dims=2 implemented"
        self.channels = channels
        self.out_channels = out_channels or channels
        self.use_conv = use_conv
        if use_conv:
            kw_key, kb_key = jax.random.split(key)
            fan_in = channels * 3 * 3
            bound = 1.0 / (fan_in ** 0.5)
            self.weight = jax.random.uniform(
                kw_key, (self.out_channels, channels, 3, 3),
                jnp.float32, -bound, bound)
            self.bias = jax.random.uniform(
                kb_key, (self.out_channels,), jnp.float32, -bound, bound)
        else:
            assert self.channels == self.out_channels

    def __call__(self, x):
        assert x.shape[1] == self.channels
        if self.use_conv:
            return downsample_conv2d(x, self.weight, self.bias)
        return downsample_avgpool2d(x)


if __name__ == "__main__":
    key = jax.random.PRNGKey(0)
    x = jax.random.normal(key, (2, 4, 16, 16), jnp.float32)   # NCHW

    # --- use_conv=True path (Cout != Cin to exercise the general case) ---
    down_conv = Downsample(channels=4, use_conv=True, dims=2, out_channels=8)
    y = jax.block_until_ready(down_conv(x))
    assert y.shape == (2, 8, 8, 8)
    ref = jax.lax.conv_general_dilated(
        x, down_conv.weight, window_strides=(2, 2), padding=((1, 1), (1, 1)),
        dimension_numbers=("NCHW", "OIHW", "NCHW"),
    ) + down_conv.bias[None, :, None, None]
    assert jnp.allclose(y, ref, atol=1e-4, rtol=1e-4), "conv mismatch"

    # --- use_conv=False path ---
    down_pool = Downsample(channels=4, use_conv=False, dims=2)
    y2 = jax.block_until_ready(down_pool(x))
    assert y2.shape == (2, 4, 8, 8)
    ref_pool = x.reshape(2, 4, 8, 2, 8, 2).mean(axis=(3, 5))
    assert jnp.allclose(y2, ref_pool, atol=1e-5, rtol=1e-5), "pool mismatch"

    print("KERNEL_OK")
</pallas_src>

<mosaic_0001>
module attributes {stable_mosaic.version = 11 : i64} {
  func.func @_conv_kernel(%arg0: i32, %arg1: i32, %arg2: memref<1x4x2x9x8xf32, #tpu.memory_space<vmem>>, %arg3: memref<1x1x2x9x8xf32, #tpu.memory_space<vmem>>, %arg4: memref<3x2x8x8xf32, #tpu.memory_space<vmem>>, %arg5: memref<1x8xf32, #tpu.memory_space<vmem>>, %arg6: memref<1x4x8x8xf32, #tpu.memory_space<vmem>>, %arg7: memref<32x8xf32, #tpu.memory_space<vmem>>) attributes {dimension_semantics = [#tpu.dimension_semantics<parallel>, #tpu.dimension_semantics<parallel>], iteration_bounds = array<i64: 2, 2>, scalar_prefetch = 0 : i64, scratch_operands = 1 : i64, tpu.core_type = #tpu.core_type<tc>, window_params = [{transform_indices = @transform_0, window_bounds = array<i64: 1, 4, 2, 9, 8>}, {transform_indices = @transform_1, window_bounds = array<i64: 1, 1, 2, 9, 8>}, {pipeline_mode = #tpu.pipeline_mode<synchronous>, transform_indices = @transform_2, window_bounds = array<i64: 3, 2, 8, 8>}, {pipeline_mode = #tpu.pipeline_mode<synchronous>, transform_indices = @transform_3, window_bounds = array<i64: 1, 8>}, {transform_indices = @transform_4, window_bounds = array<i64: 1, 4, 8, 8>}]} {
    %c0 = arith.constant 0 : index
    %c0_0 = arith.constant 0 : index
    %c0_1 = arith.constant 0 : index
    %c0_2 = arith.constant 0 : index
    %c0_3 = arith.constant 0 : index
    %0 = vector.load %arg2[%c0, %c0_0, %c0_1, %c0_2, %c0_3] : memref<1x4x2x9x8xf32, #tpu.memory_space<vmem>>, vector<1x4x2x9x8xf32>
    %1 = vector.shape_cast %0 : vector<1x4x2x9x8xf32> to vector<4x2x9x8xf32>
    %c0_4 = arith.constant 0 : index
    %c0_5 = arith.constant 0 : index
    %2 = vector.load %arg5[%c0_4, %c0_5] : memref<1x8xf32, #tpu.memory_space<vmem>>, vector<1x8xf32>
    %3 = vector.shape_cast %2 : vector<1x8xf32> to vector<1x8xf32>
    %4 = vector.broadcast %3 : vector<1x8xf32> to vector<32x8xf32>
    %c0_6 = arith.constant 0 : index
    %c0_7 = arith.constant 0 : index
    %5 = vector.load %arg7[%c0_6, %c0_7] : memref<32x8xf32, #tpu.memory_space<vmem>>, vector<32x8xf32>
    tpu.vector_store %arg7[%c0_6, %c0_7], %4 {strides = array<i32>} : memref<32x8xf32, #tpu.memory_space<vmem>>, vector<32x8xf32>,
    %c0_8 = arith.constant 0 : index
    %c0_9 = arith.constant 0 : index
    %6 = vector.load %arg7[%c0_8, %c0_9] : memref<32x8xf32, #tpu.memory_space<vmem>>, vector<32x8xf32>
    %7 = vector.extract_strided_slice %1 {offsets = [0, 0, 0, 0], sizes = [4, 1, 9, 8], strides = [1, 1, 1, 1]} : vector<4x2x9x8xf32> to vector<4x1x9x8xf32>
    %8 = vector.shape_cast %7 : vector<4x1x9x8xf32> to vector<4x9x8xf32>
    %c0_10 = arith.constant 0 : index
    %c0_11 = arith.constant 0 : index
    %c0_12 = arith.constant 0 : index
    %c0_13 = arith.constant 0 : index
    %9 = vector.load %arg4[%c0_10, %c0_11, %c0_12, %c0_13] : memref<3x2x8x8xf32, #tpu.memory_space<vmem>>, vector<1x1x8x8xf32>
    %10 = vector.shape_cast %9 : vector<1x1x8x8xf32> to vector<8x8xf32>
    %c0_14 = arith.constant 0 : index
    %c1 = arith.constant 1 : index
    %c0_15 = arith.constant 0 : index
    %c0_16 = arith.constant 0 : index
    %11 = vector.load %arg4[%c0_14, %c1, %c0_15, %c0_16] : memref<3x2x8x8xf32, #tpu.memory_space<vmem>>, vector<1x1x8x8xf32>
    %12 = vector.shape_cast %11 : vector<1x1x8x8xf32> to vector<8x8xf32>
    %13 = vector.extract_strided_slice %8 {offsets = [0, 0, 0], sizes = [4, 8, 8], strides = [1, 1, 1]} : vector<4x9x8xf32> to vector<4x8x8xf32>
    %14 = vector.shape_cast %13 : vector<4x8x8xf32> to vector<32x8xf32>
    %15 = vector.extract_strided_slice %8 {offsets = [0, 1, 0], sizes = [4, 8, 8], strides = [1, 1, 1]} : vector<4x9x8xf32> to vector<4x8x8xf32>
    %16 = vector.shape_cast %15 : vector<4x8x8xf32> to vector<32x8xf32>
    %cst = arith.constant dense<0.000000e+00> : vector<32x8xf32>
    %17 = tpu.matmul %14, %10, %cst {dimension_numbers = #tpu.dot_dimension_numbers<[1], [0], [0], [1], [0, 0, 1, 1], [], []>} : vector<32x8xf32>, vector<8x8xf32>, vector<32x8xf32> -> vector<32x8xf32>
    %cst_17 = arith.constant dense<0.000000e+00> : vector<32x8xf32>
    %18 = tpu.matmul %16, %12, %cst_17 {dimension_numbers = #tpu.dot_dimension_numbers<[1], [0], [0], [1], [0, 0, 1, 1], [], []>} : vector<32x8xf32>, vector<8x8xf32>, vector<32x8xf32> -> vector<32x8xf32>
    %19 = arith.addf %17, %18 : vector<32x8xf32>
    %20 = arith.addf %6, %19 : vector<32x8xf32>
    %c0_18 = arith.constant 0 : index
    %c0_19 = arith.constant 0 : index
    %21 = vector.load %arg7[%c0_18, %c0_19] : memref<32x8xf32, #tpu.memory_space<vmem>>, vector<32x8xf32>
    tpu.vector_store %arg7[%c0_18, %c0_19], %20 {strides = array<i32>} : memref<32x8xf32, #tpu.memory_space<vmem>>, vector<32x8xf32>,
    %c0_20 = arith.constant 0 : index
    %c0_21 = arith.constant 0 : index
    %22 = vector.load %arg7[%c0_20, %c0_21] : memref<32x8xf32, #tpu.memory_space<vmem>>, vector<32x8xf32>
    %23 = vector.extract_strided_slice %1 {offsets = [0, 1, 0, 0], sizes = [4, 1, 9, 8], strides = [1, 1, 1, 1]} : vector<4x2x9x8xf32> to vector<4x1x9x8xf32>
    %24 = vector.shape_cast %23 : vector<4x1x9x8xf32> to vector<4x9x8xf32>
    %c1_22 = arith.constant 1 : index
    %c0_23 = arith.constant 0 : index
    %c0_24 = arith.constant 0 : index
    %c0_25 = arith.constant 0 : index
    %25 = vector.load %arg4[%c1_22, %c0_23, %c0_24, %c0_25] : memref<3x2x8x8xf32, #tpu.memory_space<vmem>>, vector<1x1x8x8xf32>
    %26 = vector.shape_cast %25 : vector<1x1x8x8xf32> to vector<8x8xf32>
    %c1_26 = arith.constant 1 : index
    %c1_27 = arith.constant 1 : index
    %c0_28 = arith.constant 0 : index
    %c0_29 = arith.constant 0 : index
    %27 = vector.load %arg4[%c1_26, %c1_27, %c0_28, %c0_29] : memref<3x2x8x8xf32, #tpu.memory_space<vmem>>, vector<1x1x8x8xf32>
    %28 = vector.shape_cast %27 : vector<1x1x8x8xf32> to vector<8x8xf32>
    %29 = vector.extract_strided_slice %24 {offsets = [0, 0, 0], sizes = [4, 8, 8], strides = [1, 1, 1]} : vector<4x9x8xf32> to vector<4x8x8xf32>
    %30 = vector.shape_cast %29 : vector<4x8x8xf32> to vector<32x8xf32>
    %31 = vector.extract_strided_slice %24 {offsets = [0, 1, 0], sizes = [4, 8, 8], strides = [1, 1, 1]} : vector<4x9x8xf32> to vector<4x8x8xf32>
    %32 = vector.shape_cast %31 : vector<4x8x8xf32> to vector<32x8xf32>
    %cst_30 = arith.constant dense<0.000000e+00> : vector<32x8xf32>
    %33 = tpu.matmul %30, %26, %cst_30 {dimension_numbers = #tpu.dot_dimension_numbers<[1], [0], [0], [1], [0, 0, 1, 1], [], []>} : vector<32x8xf32>, vector<8x8xf32>, vector<32x8xf32> -> vector<32x8xf32>
    %cst_31 = arith.constant dense<0.000000e+00> : vector<32x8xf32>
    %34 = tpu.matmul %32, %28, %cst_31 {dimension_numbers = #tpu.dot_dimension_numbers<[1], [0], [0], [1], [0, 0, 1, 1], [], []>} : vector<32x8xf32>, vector<8x8xf32>, vector<32x8xf32> -> vector<32x8xf32>
    %35 = arith.addf %33, %34 : vector<32x8xf32>
    %36 = arith.addf %22, %35 : vector<32x8xf32>
    %c0_32 = arith.constant 0 : index
    %c0_33 = arith.constant 0 : index
    %37 = vector.load %arg7[%c0_32, %c0_33] : memref<32x8xf32, #tpu.memory_space<vmem>>, vector<32x8xf32>
    tpu.vector_store %arg7[%c0_32, %c0_33], %36 {strides = array<i32>} : memref<32x8xf32, #tpu.memory_space<vmem>>, vector<32x8xf32>,
    %c0_34 = arith.constant 0 : index
    %c0_35 = arith.constant 0 : index
    %38 = vector.load %arg7[%c0_34, %c0_35] : memref<32x8xf32, #tpu.memory_space<vmem>>, vector<24x8xf32>
    %39 = vector.extract_strided_slice %1 {offsets = [1, 0, 0, 0], sizes = [3, 1, 9, 8], strides = [1, 1, 1, 1]} : vector<4x2x9x8xf32> to vector<3x1x9x8xf32>
    %40 = vector.shape_cast %39 : vector<3x1x9x8xf32> to vector<3x9x8xf32>
    %c2 = arith.constant 2 : index
    %c0_36 = arith.constant 0 : index
    %c0_37 = arith.constant 0 : index
    %c0_38 = arith.constant 0 : index
    %41 = vector.load %arg4[%c2, %c0_36, %c0_37, %c0_38] : memref<3x2x8x8xf32, #tpu.memory_space<vmem>>, vector<1x1x8x8xf32>
    %42 = vector.shape_cast %41 : vector<1x1x8x8xf32> to vector<8x8xf32>
    %c2_39 = arith.constant 2 : index
    %c1_40 = arith.constant 1 : index
    %c0_41 = arith.constant 0 : index
    %c0_42 = arith.constant 0 : index
    %43 = vector.load %arg4[%c2_39, %c1_40, %c0_41, %c0_42] : memref<3x2x8x8xf32, #tpu.memory_space<vmem>>, vector<1x1x8x8xf32>
    %44 = vector.shape_cast %43 : vector<1x1x8x8xf32> to vector<8x8xf32>
    %45 = vector.extract_strided_slice %40 {offsets = [0, 0, 0], sizes = [3, 8, 8], strides = [1, 1, 1]} : vector<3x9x8xf32> to vector<3x8x8xf32>
    %46 = vector.shape_cast %45 : vector<3x8x8xf32> to vector<24x8xf32>
    %47 = vector.extract_strided_slice %40 {offsets = [0, 1, 0], sizes = [3, 8, 8], strides = [1, 1, 1]} : vector<3x9x8xf32> to vector<3x8x8xf32>
    %48 = vector.shape_cast %47 : vector<3x8x8xf32> to vector<24x8xf32>
    %cst_43 = arith.constant dense<0.000000e+00> : vector<24x8xf32>
    %49 = tpu.matmul %46, %42, %cst_43 {dimension_numbers = #tpu.dot_dimension_numbers<[1], [0], [0], [1], [0, 0, 1, 1], [], []>} : vector<24x8xf32>, vector<8x8xf32>, vector<24x8xf32> -> vector<24x8xf32>
    %cst_44 = arith.constant dense<0.000000e+00> : vector<24x8xf32>
    %50 = tpu.matmul %48, %44, %cst_44 {dimension_numbers = #tpu.dot_dimension_numbers<[1], [0], [0], [1], [0, 0, 1, 1], [], []>} : vector<24x8xf32>, vector<8x8xf32>, vector<24x8xf32> -> vector<24x8xf32>
    %51 = arith.addf %49, %50 : vector<24x8xf32>
    %52 = arith.addf %38, %51 : vector<24x8xf32>
    %c0_45 = arith.constant 0 : index
    %c0_46 = arith.constant 0 : index
    %53 = vector.load %arg7[%c0_45, %c0_46] : memref<32x8xf32, #tpu.memory_space<vmem>>, vector<24x8xf32>
    tpu.vector_store %arg7[%c0_45, %c0_46], %52 {strides = array<i32>} : memref<32x8xf32, #tpu.memory_space<vmem>>, vector<24x8xf32>,
    %c24 = arith.constant 24 : index
    %c0_47 = arith.constant 0 : index
    %54 = vector.load %arg7[%c24, %c0_47] : memref<32x8xf32, #tpu.memory_space<vmem>>, vector<8x8xf32>
    %c0_48 = arith.constant 0 : index
    %c0_49 = arith.constant 0 : index
    %c0_50 = arith.constant 0 : index
    %c0_51 = arith.constant 0 : index
    %c0_52 = arith.constant 0 : index
    %55 = vector.load %arg3[%c0_48, %c0_49, %c0_50, %c0_51, %c0_52] : memref<1x1x2x9x8xf32, #tpu.memory_space<vmem>>, vector<1x1x1x9x8xf32>
    %56 = vector.shape_cast %55 : vector<1x1x1x9x8xf32> to vector<1x9x8xf32>
    %c2_53 = arith.constant 2 : index
    %c0_54 = arith.constant 0 : index
    %c0_55 = arith.constant 0 : index
    %c0_56 = arith.constant 0 : index
    %57 = vector.load %arg4[%c2_53, %c0_54, %c0_55, %c0_56] : memref<3x2x8x8xf32, #tpu.memory_space<vmem>>, vector<1x1x8x8xf32>
    %58 = vector.shape_cast %57 : vector<1x1x8x8xf32> to vector<8x8xf32>
    %c2_57 = arith.constant 2 : index
    %c1_58 = arith.constant 1 : index
    %c0_59 = arith.constant 0 : index
    %c0_60 = arith.constant 0 : index
    %59 = vector.load %arg4[%c2_57, %c1_58, %c0_59, %c0_60] : memref<3x2x8x8xf32, #tpu.memory_space<vmem>>, vector<1x1x8x8xf32>
    %60 = vector.shape_cast %59 : vector<1x1x8x8xf32> to vector<8x8xf32>
    %61 = vector.extract_strided_slice %56 {offsets = [0, 0, 0], sizes = [1, 8, 8], strides = [1, 1, 1]} : vector<1x9x8xf32> to vector<1x8x8xf32>
    %62 = vector.shape_cast %61 : vector<1x8x8xf32> to vector<8x8xf32>
    %63 = vector.extract_strided_slice %56 {offsets = [0, 1, 0], sizes = [1, 8, 8], strides = [1, 1, 1]} : vector<1x9x8xf32> to vector<1x8x8xf32>
    %64 = vector.shape_cast %63 : vector<1x8x8xf32> to vector<8x8xf32>
    %cst_61 = arith.constant dense<0.000000e+00> : vector<8x8xf32>
    %65 = tpu.matmul %62, %58, %cst_61 {dimension_numbers = #tpu.dot_dimension_numbers<[1], [0], [0], [1], [0, 0, 1, 1], [], []>} : vector<8x8xf32>, vector<8x8xf32>, vector<8x8xf32> -> vector<8x8xf32>
    %cst_62 = arith.constant dense<0.000000e+00> : vector<8x8xf32>
    %66 = tpu.matmul %64, %60, %cst_62 {dimension_numbers = #tpu.dot_dimension_numbers<[1], [0], [0], [1], [0, 0, 1, 1], [], []>} : vector<8x8xf32>, vector<8x8xf32>, vector<8x8xf32> -> vector<8x8xf32>
    %67 = arith.addf %65, %66 : vector<8x8xf32>
    %68 = arith.addf %54, %67 : vector<8x8xf32>
    %c24_63 = arith.constant 24 : index
    %c0_64 = arith.constant 0 : index
    %69 = vector.load %arg7[%c24_63, %c0_64] : memref<32x8xf32, #tpu.memory_space<vmem>>, vector<8x8xf32>
    tpu.vector_store %arg7[%c24_63, %c0_64], %68 {strides = array<i32>} : memref<32x8xf32, #tpu.memory_space<vmem>>, vector<8x8xf32>,
    %c0_65 = arith.constant 0 : index
    %c0_66 = arith.constant 0 : index
    %70 = vector.load %arg7[%c0_65, %c0_66] : memref<32x8xf32, #tpu.memory_space<vmem>>, vector<32x8xf32>
    %71 = vector.shape_cast %70 : vector<32x8xf32> to vector<4x8x8xf32>
    %c0_67 = arith.constant 0 : index
    %c0_68 = arith.constant 0 : index
    %c0_69 = arith.constant 0 : index
    %c0_70 = arith.constant 0 : index
    %72 = vector.load %arg6[%c0_67, %c0_68, %c0_69, %c0_70] : memref<1x4x8x8xf32, #tpu.memory_space<vmem>>, vector<1x4x8x8xf32>
    %73 = vector.shape_cast %72 : vector<1x4x8x8xf32> to vector<4x8x8xf32>
    %74 = vector.shape_cast %71 : vector<4x8x8xf32> to vector<1x4x8x8xf32>
    tpu.vector_store %arg6[%c0_67, %c0_68, %c0_69, %c0_70], %74 {strides = array<i32>} : memref<1x4x8x8xf32, #tpu.memory_space<vmem>>, vector<1x4x8x8xf32>,
    return
  }
  func.func @transform_0(%arg0: i32, %arg1: i32) -> (i32, i32, i32, i32, i32) {
    %c0_i32 = arith.constant 0 : i32
    %c0_i32_0 = arith.constant 0 : i32
    %c0_i32_1 = arith.constant 0 : i32
    %c0_i32_2 = arith.constant 0 : i32
    return %arg0, %arg1, %c0_i32, %c0_i32_0, %c0_i32_1 : i32, i32, i32, i32, i32
  }
  func.func @transform_1(%arg0: i32, %arg1: i32) -> (i32, i32, i32, i32, i32) {
    %c1_i32 = arith.constant 1 : i32
    %0 = arith.addi %arg1, %c1_i32 : i32
    %c4_i32 = arith.constant 4 : i32
    %1 = arith.muli %0, %c4_i32 : i32
    %c0_i32 = arith.constant 0 : i32
    %c0_i32_0 = arith.constant 0 : i32
    %c0_i32_1 = arith.constant 0 : i32
    %c0_i32_2 = arith.constant 0 : i32
    return %arg0, %1, %c0_i32, %c0_i32_0, %c0_i32_1 : i32, i32, i32, i32, i32
  }
  func.func @transform_2(%arg0: i32, %arg1: i32) -> (i32, i32, i32, i32) {
    %c0_i32 = arith.constant 0 : i32
    %c0_i32_0 = arith.constant 0 : i32
    %c0_i32_1 = arith.constant 0 : i32
    %c0_i32_2 = arith.constant 0 : i32
    %c0_i32_3 = arith.constant 0 : i32
    return %c0_i32, %c0_i32_0, %c0_i32_1, %c0_i32_2 : i32, i32, i32, i32
  }
  func.func @transform_3(%arg0: i32, %arg1: i32) -> (i32, i32) {
    %c0_i32 = arith.constant 0 : i32
    %c0_i32_0 = arith.constant 0 : i32
    %c0_i32_1 = arith.constant 0 : i32
    return %c0_i32, %c0_i32_0 : i32, i32
  }
  func.func @transform_4(%arg0: i32, %arg1: i32) -> (i32, i32, i32, i32) {
    %c0_i32 = arith.constant 0 : i32
    %c0_i32_0 = arith.constant 0 : i32
    %c0_i32_1 = arith.constant 0 : i32
    return %arg0, %arg1, %c0_i32, %c0_i32_0 : i32, i32, i32, i32
  }
}

</mosaic_0001>

<llo_original>
// kernel: downsample_conv2d.1
$region0: #{downsample_conv2d.1}
  #allocation0 [shape = 'u32[]', space=smem, size = 0x4, offset = 0x4, fixed_abs, tag = 'smem constant byte address 0x4 - core index']
  #allocation1 [shape = 'u32[72,128]{1,0:T(1,128)}', space=vmem, size = 0x9000, scoped, tag = 'internal scratch']
  #allocation2 [shape = 'f32[32,8]{1,0:T(8,128)}', space=vmem, size = 0x4000, scoped, tag = 'scratch operand']
  %s0 = inlined_call_operand.vmem [shape: f32[2,9,2,9,8], index: 0, kind: input, shape index: {}, may-alias: {0,1}]
  %s1 = inlined_call_operand.vmem [shape: f32[2,9,2,9,8], index: 1, kind: input, shape index: {}, may-alias: {0,1}]
  %s2 = inlined_call_operand.vmem [shape: f32[3,2,8,8], index: 2, kind: input, shape index: {}]
  %s3 = inlined_call_operand.vmem [shape: f32[1,8], index: 3, kind: input, shape index: {}]
  %s4 = inlined_call_operand.vmem [shape: f32[2,8,8,8], index: 4, kind: output, shape index: {}]
  %s5 = sld [smem:[#allocation0]]
  $region49: #{downsample_conv2d.1} parent=0
    _
  %s7 = ssub.s32 1, %s5
  %s8 = scalar_select 0, %s7, %s5
  loop: start=0, step=1, limit=6
  $region2: #{downsample_conv2d.1} parent=0 // loop_pre_header
    _
  $region3: #{downsample_conv2d.1} parent=0 // loop_header
    %s10 = sphi 0, %s14
    %p11 = scmp.ge.s32.totalorder %s10, 6
    %s17 = sphi 0, %s29
    %s18 = sphi 0, %s25
    %s19 = sphi 0, %s17
    %s20 = sphi 0, %s18
    %s21 = sphi 0, %s19
    %s22 = sphi 0, %s20
    %s34 = sphi 0, %s36
    %s37 = sphi 0, %s34
    %s38 = sphi 0, %s37
    %s54 = sphi 0, %s38
    %s66 = sphi 0, %s68
    %s69 = sphi 0, %s66
    %s70 = sphi 0, %s69
    %s86 = sphi 0, %s70
    %s90 = sphi 0, %s90
    %s92 = sphi 0, %s90
    %s93 = sphi 0, %s92
    %s107 = sphi 0, %s93
    %s111 = sphi 0, %s111
    %s113 = sphi 0, %s111
    %s114 = sphi 0, %s113
    %s128 = sphi 0, %s114
    %s136 = sphi 0, %s138
    %s139 = sphi 0, %s136
    %s140 = sphi 0, %s139
    %s156 = sphi 0, %s140
  $region4: #{downsample_conv2d.1} parent=0 // loop_header_branch
    %13 = sbr.rel (%p11) target = $region8
  $region5: #{downsample_conv2d.1} parent=0 // loop_body
    %s15 = ssub.s32 %s10, 1
    %s16 = ssub.s32 %s10, 2
    %s23 = sadd.s32 1, %s18
    %p24 = scmp.ge.s32.totalorder %s23, 2
    %s25 = scalar_select %p24, 0, %s23
    %s26 = sadd.s32 1, %s17
    %s27 = scalar_select %p24, %s26, %s17
    %p28 = scmp.ge.s32.totalorder %s27, 2
    %s29 = scalar_select %p28, 0, %s27
    %s30 = ssub.s32 %s17, %s29
    %s31 = ssub.s32 %s18, %s25
    %s32 = sor.u32 %s30, %s31
    %p33 = scmp.eq.s32.totalorder %s32, 0
    %s35 = sadd.s32 %s34, 1
    %s36 = scalar_select %p33, %s34, %s35
    %p39 = pneg %p33
    %p40 = scmp.eq.s32.totalorder %s10, 3
    %p41 = por %p39, %p40
    %p42 = scmp.ne.s32.totalorder %s34, %s37
    %p43 = scmp.eq.s32.totalorder %s10, 0
    %p44 = por %p42, %p43
    %p45 = scmp.ne.s32.totalorder %s34, %s37
    %p46 = scmp.eq.s32.totalorder %s15, 3
    %p47 = por %p45, %p46
    %p48 = scmp.ne.s32.totalorder %s37, %s38
    %p49 = scmp.eq.s32.totalorder %s15, 0
    %p50 = por %p48, %p49
    %p51 = scmp.ne.s32.totalorder %s37, %s38
    %p52 = scmp.eq.s32.totalorder %s16, 3
    %p53 = por %p51, %p52
    %p55 = scmp.ne.s32.totalorder %s38, %s54
    %p56 = scmp.eq.s32.totalorder %s16, 0
    %p57 = por %p55, %p56
    %s58 = sadd.s32 %s18, 1
    %s59 = smul.u32 %s58, 4
    %s60 = sadd.s32 %s25, 1
    %s61 = smul.u32 %s60, 4
    %s62 = ssub.s32 %s17, %s29
    %s63 = ssub.s32 %s59, %s61
    %s64 = sor.u32 %s62, %s63
    %p65 = scmp.eq.s32.totalorder %s64, 0
    %s67 = sadd.s32 %s66, 1
    %s68 = scalar_select %p65, %s66, %s67
    %p71 = pneg %p65
    %p72 = scmp.eq.s32.totalorder %s10, 3
    %p73 = por %p71, %p72
    %p74 = scmp.ne.s32.totalorder %s66, %s69
    %p75 = scmp.eq.s32.totalorder %s10, 0
    %p76 = por %p74, %p75
    %p77 = scmp.ne.s32.totalorder %s66, %s69
    %p78 = scmp.eq.s32.totalorder %s15, 3
    %p79 = por %p77, %p78
    %p80 = scmp.ne.s32.totalorder %s69, %s70
    %p81 = scmp.eq.s32.totalorder %s15, 0
    %p82 = por %p80, %p81
    %p83 = scmp.ne.s32.totalorder %s69, %s70
    %p84 = scmp.eq.s32.totalorder %s16, 3
    %p85 = por %p83, %p84
    %p87 = scmp.ne.s32.totalorder %s70, %s86
    %p88 = scmp.eq.s32.totalorder %s16, 0
    %p89 = por %p87, %p88
    %s91 = sadd.s32 %s90, 1
    %p94 = scmp.eq.s32.totalorder %s10, 3
    %p95 = scmp.ne.s32.totalorder %s90, %s92
    %p96 = scmp.eq.s32.totalorder %s10, 0
    %p97 = por %p95, %p96
    %p98 = scmp.ne.s32.totalorder %s90, %s92
    %p99 = scmp.eq.s32.totalorder %s15, 3
    %p100 = por %p98, %p99
    %p101 = scmp.ne.s32.totalorder %s92, %s93
    %p102 = scmp.eq.s32.totalorder %s15, 0
    %p103 = por %p101, %p102
    %p104 = scmp.ne.s32.totalorder %s92, %s93
    %p105 = scmp.eq.s32.totalorder %s16, 3
    %p106 = por %p104, %p105
    %p108 = scmp.ne.s32.totalorder %s93, %s107
    %p109 = scmp.eq.s32.totalorder %s16, 0
    %p110 = por %p108, %p109
    %s112 = sadd.s32 %s111, 1
    %p115 = scmp.eq.s32.totalorder %s10, 3
    %p116 = scmp.ne.s32.totalorder %s111, %s113
    %p117 = scmp.eq.s32.totalorder %s10, 0
    %p118 = por %p116, %p117
    %p119 = scmp.ne.s32.totalorder %s111, %s113
    %p120 = scmp.eq.s32.totalorder %s15, 3
    %p121 = por %p119, %p120
    %p122 = scmp.ne.s32.totalorder %s113, %s114
    %p123 = scmp.eq.s32.totalorder %s15, 0
    %p124 = por %p122, %p123
    %p125 = scmp.ne.s32.totalorder %s113, %s114
    %p126 = scmp.eq.s32.totalorder %s16, 3
    %p127 = por %p125, %p126
    %p129 = scmp.ne.s32.totalorder %s114, %s128
    %p130 = scmp.eq.s32.totalorder %s16, 0
    %p131 = por %p129, %p130
    %s132 = ssub.s32 %s17, %s29
    %s133 = ssub.s32 %s18, %s25
    %s134 = sor.u32 %s132, %s133
    %p135 = scmp.eq.s32.totalorder %s134, 0
    %s137 = sadd.s32 %s136, 1
    %s138 = scalar_select %p135, %s136, %s137
    %p141 = pneg %p135
    %p142 = scmp.eq.s32.totalorder %s10, 3
    %p143 = por %p141, %p142
    %p144 = scmp.ne.s32.totalorder %s136, %s139
    %p145 = scmp.eq.s32.totalorder %s10, 0
    %p146 = por %p144, %p145
    %p147 = scmp.ne.s32.totalorder %s136, %s139
    %p148 = scmp.eq.s32.totalorder %s15, 3
    %p149 = por %p147, %p148
    %p150 = scmp.ne.s32.totalorder %s139, %s140
    %p151 = scmp.eq.s32.totalorder %s15, 0
    %p152 = por %p150, %p151
    %p153 = scmp.ne.s32.totalorder %s139, %s140
    %p154 = scmp.eq.s32.totalorder %s16, 3
    %p155 = por %p153, %p154
    %p157 = scmp.ne.s32.totalorder %s140, %s156
    %p158 = scmp.eq.s32.totalorder %s16, 0
    %p159 = por %p157, %p158
    %p160 = scmp.le.s32.totalorder 1, %s10
    %p161 = scmp.lt.s32.totalorder %s10, 5
    %p162 = pnand %p160, %p161
    %p163 = pneg %p162
    // Predicated region
    $region9: #{downsample_conv2d.1} parent=5 // pred_check
      _
    $region10: #{downsample_conv2d.1} parent=5 // pred_check_branch
      %165 = sbr.rel (%p162) target = $region12
    $region11: #{downsample_conv2d.1} parent=5 // pred_region
      %s166 = ssub.s32 %s10, 1
      // Predicated region
      $region13: #{downsample_conv2d.1} parent=11 // pred_check
        %p167 = pneg %p103
      $region14: #{downsample_conv2d.1} parent=11 // pred_check_branch
        %169 = sbr.rel (%p167) target = $region16
      $region15: #{downsample_conv2d.1} parent=11 // pred_region
        _
      $region16: #{downsample_conv2d.1} parent=11 // pred_fallthru
        _
      // Predicated region
      $region17: #{downsample_conv2d.1} parent=11 // pred_check
        %p170 = pneg %p124
      $region18: #{downsample_conv2d.1} parent=11 // pred_check_branch
        %172 = sbr.rel (%p170) target = $region20
      $region19: #{downsample_conv2d.1} parent=11 // pred_region
        _
      $region20: #{downsample_conv2d.1} parent=11 // pred_fallthru
        _
    $region12: #{downsample_conv2d.1} parent=5 // pred_fallthru
      _
    %p173 = scmp.lt.s32.totalorder %s10, 4
    // Predicated region
    $region21: #{downsample_conv2d.1} parent=5 // pred_check
      %p174 = pneg %p173
    $region22: #{downsample_conv2d.1} parent=5 // pred_check_branch
      %176 = sbr.rel (%p174) target = $region24
    $region23: #{downsample_conv2d.1} parent=5 // pred_region
      // Predicated region
      $region25: #{downsample_conv2d.1} parent=23 // pred_check
        %p177 = pneg %p44
      $region26: #{downsample_conv2d.1} parent=23 // pred_check_branch
        %179 = sbr.rel (%p177) target = $region28
      $region27: #{downsample_conv2d.1} parent=23 // pred_region
        %s180 = smul.u32 4, %s18
        %s181 = ssub.s32 9, %s180
        %p182 = scmp.lt.s32.totalorder %s181, 4
        %s183 = scalar_select %p182, %s181, 4
        %s184 = smul.u32 8, %s183
        %s185 = smul.u32 %s184, 2
        %s186 = smul.u32 %s185, 2
        %p187 = scmp.lt.s32.totalorder %s17, 1
        %s188 = scalar_select %p187, %s17, 1
        %p189 = scmp.lt.s32.totalorder %s180, 8
        %s190 = scalar_select %p189, %s180, 8
        %s191 = smul.addr %s190, 4
        %s192 = smul.addr %s188, 36
        %s193 = sadd.s32 %s191, %s192
        %s194 = smul.addr %s193, 8
        %s195 = scalar_lea.vmem %s0, %s194
        %s196 = smul.u32 4, %s18
        %s197 = ssub.s32 9, %s196
        %p198 = scmp.lt.s32.totalorder %s197, 4
        %s199 = scalar_select %p198, %s197, 4
        %s200 = smul.u32 8, %s199
        %s201 = smul.u32 %s200, 2
        %s202 = smul.u32 %s201, 2
      $region28: #{downsample_conv2d.1} parent=23 // pred_fallthru
        _
      // Predicated region
      $region29: #{downsample_conv2d.1} parent=23 // pred_check
        %p203 = pneg %p76
      $region30: #{downsample_conv2d.1} parent=23 // pred_check_branch
        %205 = sbr.rel (%p203) target = $region32
      $region31: #{downsample_conv2d.1} parent=23 // pred_region
        %s206 = sadd.s32 %s18, 1
        %s207 = smul.u32 %s206, 4
        %p208 = scmp.lt.s32.totalorder %s17, 1
        %s209 = scalar_select %p208, %s17, 1
        %p210 = scmp.lt.s32.totalorder %s207, 8
        %s211 = scalar_select %p210, %s207, 8
        %s212 = smul.addr %s211, 4
        %s213 = smul.addr %s209, 36
        %s214 = sadd.s32 %s212, %s213
        %s215 = smul.addr %s214, 8
        %s216 = scalar_lea.vmem %s1, %s215
        %s217 = sadd.s32 %s18, 1
        %s218 = smul.u32 %s217, 4
      $region32: #{downsample_conv2d.1} parent=23 // pred_fallthru
        _
    $region24: #{downsample_conv2d.1} parent=5 // pred_fallthru
      _
    %p219 = scmp.le.s32.totalorder 1, %s10
    %p220 = scmp.lt.s32.totalorder %s10, 5
    %p221 = pnand %p219, %p220
    %p222 = pneg %p221
    // Predicated region
    $region33: #{downsample_conv2d.1} parent=5 // pred_check
      _
    $region34: #{downsample_conv2d.1} parent=5 // pred_check_branch
      %224 = sbr.rel (%p221) target = $region36
    $region35: #{downsample_conv2d.1} parent=5 // pred_region
      %s225 = ssub.s32 %s10, 1
      %s226 = smul.u32 4, %s20
      %s227 = ssub.s32 9, %s226
      %p228 = scmp.lt.s32.totalorder %s227, 4
      %s229 = scalar_select %p228, %s227, 4
      %s230 = smul.u32 8, %s229
      %s231 = smul.u32 %s230, 2
      %s232 = smul.u32 %s231, 2
      %p233 = scmp.lt.s32.totalorder %s19, 1
      %s234 = scalar_select %p233, %s19, 1
      %p235 = scmp.lt.s32.totalorder %s226, 8
      %s236 = scalar_select %p235, %s226, 8
      %s237 = smul.addr %s236, 4
      %s238 = smul.addr %s234, 36
      %s239 = sadd.s32 %s237, %s238
      %s240 = smul.addr %s239, 8
      %s241 = scalar_lea.vmem %s0, %s240
      %p242 = pneg %p50
      %p243 = pneg %p47
      %s244 = sadd.s32 %s20, 1
      %s245 = smul.u32 %s244, 4
      %p246 = scmp.lt.s32.totalorder %s19, 1
      %s247 = scalar_select %p246, %s19, 1
      %p248 = scmp.lt.s32.totalorder %s245, 8
      %s249 = scalar_select %p248, %s245, 8
      %s250 = smul.addr %s249, 4
      %s251 = smul.addr %s247, 36
      %s252 = sadd.s32 %s250, %s251
      %s253 = smul.addr %s252, 8
      %s254 = scalar_lea.vmem %s1, %s253
      %p255 = pneg %p82
      %p256 = pneg %p79
      %p257 = pneg %p103
      %p258 = pneg %p100
      %p259 = pneg %p124
      %p260 = pneg %p121
      %p261 = pneg %p152
      %p262 = pneg %p149
      %s263 = smul.u32 4, %s20
      %p264 = scmp.lt.s32.totalorder %s19, 1
      %s265 = scalar_select %p264, %s19, 1
      %p266 = scmp.lt.s32.totalorder %s263, 7
      %s267 = scalar_select %p266, %s263, 7
      %s268 = smul.addr %s265, 8
      %s269 = sadd.s32 %s267, %s268
      %s270 = smul.addr %s269, 8
      %s271 = scalar_lea.vmem %s4, %s270
      %s272 = smul.u32 4, %s20
      %s273 = ssub.s32 9, %s272
      %p274 = scmp.lt.s32.totalorder %s273, 4
      %s275 = scalar_select %p274, %s273, 4
      %s276 = smul.u32 8, %s275
      %s277 = smul.u32 %s276, 2
      %s278 = smul.u32 %s277, 2
      %p279 = scmp.lt.s32.totalorder %s19, 1
      %s280 = scalar_select %p279, %s19, 1
      %p281 = scmp.lt.s32.totalorder %s272, 8
      %s282 = scalar_select %p281, %s272, 8
      %s283 = smul.addr %s282, 4
      %s284 = smul.addr %s280, 36
      %s285 = sadd.s32 %s283, %s284
      %s286 = smul.addr %s285, 8
      %s287 = scalar_lea.vmem %s0, %s286
      %s288 = smul.u32 4, %s20
      %s289 = ssub.s32 9, %s288
      %p290 = scmp.lt.s32.totalorder %s289, 4
      %s291 = scalar_select %p290, %s289, 4
      %s292 = smul.u32 8, %s291
      %s293 = smul.u32 %s292, 2
      %s294 = smul.u32 %s293, 2
      %s295 = sadd.s32 %s20, 1
      %s296 = smul.u32 %s295, 4
      %p297 = scmp.lt.s32.totalorder %s19, 1
      %s298 = scalar_select %p297, %s19, 1
      %p299 = scmp.lt.s32.totalorder %s296, 8
      %s300 = scalar_select %p299, %s296, 8
      %s301 = smul.addr %s300, 4
      %s302 = smul.addr %s298, 36
      %s303 = sadd.s32 %s301, %s302
      %s304 = smul.addr %s303, 8
      %s305 = scalar_lea.vmem %s1, %s304
      %s306 = sadd.s32 %s20, 1
      %s307 = smul.u32 %s306, 4
      %s308 = smul.u32 4, %s20
      %p309 = scmp.lt.s32.totalorder %s19, 1
      %s310 = scalar_select %p309, %s19, 1
      %p311 = scmp.lt.s32.totalorder %s308, 7
      %s312 = scalar_select %p311, %s308, 7
      %s313 = smul.addr %s310, 8
      %s314 = sadd.s32 %s312, %s313
      %s315 = smul.addr %s314, 8
      %s316 = scalar_lea.vmem %s4, %s315
      %s317 = smul.u32 4, %s20
      %v318 = vld [vmem:[%s287] sm:$0xff]
      %v319 = vld [vmem:[%s287 + $0x8] sm:$0x1]
      %v320 = vld [vmem:[%s287 + $0x10] sm:$0xff]
      %v321 = vld [vmem:[%s287 + $0x18] sm:$0x1]
      %v322 = vld [vmem:[%s287 + $0x20] sm:$0xff]
      %v323 = vld [vmem:[%s287 + $0x28] sm:$0x1]
      %v324 = vld [vmem:[%s287 + $0x30] sm:$0xff]
      %v325 = vld [vmem:[%s287 + $0x38] sm:$0x1]
      %v326 = vld [vmem:[%s287 + $0x40] sm:$0xff]
      %v327 = vld [vmem:[%s287 + $0x48] sm:$0x1]
      %v328 = vld [vmem:[%s287 + $0x50] sm:$0xff]
      %v329 = vld [vmem:[%s287 + $0x58] sm:$0x1]
      %v330 = vld [vmem:[%s287 + $0x60] sm:$0xff]
      %v331 = vld [vmem:[%s287 + $0x68] sm:$0x1]
      %v332 = vld [vmem:[%s287 + $0x70] sm:$0xff]
      %v333 = vld [vmem:[%s287 + $0x78] sm:$0x1]
      %v334 = vld [vmem:[%s3] sm:$0x1]
      %v336 = vperm.slane %v334, 0
      %vm338 = vcmask 64512
      %339 = vst.msk [vmem:[#allocation2] sm:$0xff] %vm338, %v336
      %340 = vst.msk [vmem:[#allocation2 + $0x8] sm:$0xff] %vm338, %v336
      %341 = vst.msk [vmem:[#allocation2 + $0x10] sm:$0xff] %vm338, %v336
      %342 = vst.msk [vmem:[#allocation2 + $0x18] sm:$0xff] %vm338, %v336
      %v343 = vld [vmem:[#allocation2] sm:$0xff]
      %v344 = vld [vmem:[#allocation2 + $0x8] sm:$0xff]
      %v345 = vld [vmem:[#allocation2 + $0x10] sm:$0xff]
      %v346 = vld [vmem:[#allocation2 + $0x18] sm:$0xff]
      %v347 = vld [vmem:[%s2] sm:$0xff]
      %s348 = scalar_lea.vmem %s2, 8
      %v349 = vld [vmem:[%s348] sm:$0xff]
      %vm358 = vcmask 1046528
      %v359 = vrot.slane %v318, 1
      %v360 = vrot.slane %v319, 1
      %v361 = vsel %vm358, %v359, %v360
      %v362 = vrot.slane %v322, 1
      %v363 = vrot.slane %v323, 1
      %v364 = vsel %vm358, %v362, %v363
      %v365 = vrot.slane %v326, 1
      %v366 = vrot.slane %v327, 1
      %v367 = vsel %vm358, %v365, %v366
      %v368 = vrot.slane %v330, 1
      %v369 = vrot.slane %v331, 1
      %v370 = vsel %vm358, %v368, %v369
      %v371 = vsel %vm338, %v361, 0
      %v373 = vsel %vm338, %v364, 0
      %v375 = vsel %vm338, %v367, 0
      %v377 = vsel %vm338, %v370, 0
      %379 = vmatpush.msra.mxu0 0.0
      %380 = vmatpush.msra.mxu0 0.0
      %381 = vmatpush.msra.mxu0 0.0
      %382 = vmatpush.msra.mxu0 0.0
      %383 = vmatpush.msra.mxu0 0.0
      %384 = vmatpush.msra.mxu0 0.0
      %385 = vmatpush.msra.mxu0 0.0
      %386 = vmatpush.msra.mxu0 0.0
      %387 = vmatpush.msra.mxu0 0.0
      %388 = vmatpush.msra.mxu0 0.0
      %389 = vmatpush.msra.mxu0 0.0
      %390 = vmatpush.msra.mxu0 0.0
      %391 = vmatpush.msra.mxu0 0.0
      %392 = vmatpush.msra.mxu0 0.0
      %393 = vmatpush.msra.mxu0 0.0
      %394 = vmatpush.msra.mxu0 %v349
      %395 = vmatmul.f32.gmra.mxu0 %v371
      %v396 = vpop.f32.mrf.mxu0
      %v397 = vadd.f32 0.0, %v396
      %398 = vmatmul.f32.gmra.mxu0 %v373
      %v399 = vpop.f32.mrf.mxu0
      %v400 = vadd.f32 0.0, %v399
      %401 = vmatmul.f32.gmra.mxu0 %v375
      %v402 = vpop.f32.mrf.mxu0
      %v403 = vadd.f32 0.0, %v402
      %404 = vmatmul.f32.gmra.mxu0 %v377
      %v405 = vpop.f32.mrf.mxu0
      %v406 = vadd.f32 0.0, %v405
      %407 = vdwg.mxu0
      %v408 = vsel %vm338, %v318, 0
      %v410 = vsel %vm338, %v322, 0
      %v412 = vsel %vm338, %v326, 0
      %v414 = vsel %vm338, %v330, 0
      %416 = vmatpush.msra.mxu0 0.0
      %417 = vmatpush.msra.mxu0 0.0
      %418 = vmatpush.msra.mxu0 0.0
      %419 = vmatpush.msra.mxu0 0.0
      %420 = vmatpush.msra.mxu0 0.0
      %421 = vmatpush.msra.mxu0 0.0
      %422 = vmatpush.msra.mxu0 0.0
      %423 = vmatpush.msra.mxu0 0.0
      %424 = vmatpush.msra.mxu0 0.0
      %425 = vmatpush.msra.mxu0 0.0
      %426 = vmatpush.msra.mxu0 0.0
      %427 = vmatpush.msra.mxu0 0.0
      %428 = vmatpush.msra.mxu0 0.0
      %429 = vmatpush.msra.mxu0 0.0
      %430 = vmatpush.msra.mxu0 0.0
      %431 = vmatpush.msra.mxu0 %v347
      %432 = vmatmul.f32.gmra.mxu0 %v408
      %v433 = vpop.f32.mrf.mxu0
      %v434 = vadd.f32 %v397, %v433
      %435 = vmatmul.f32.gmra.mxu0 %v410
      %v436 = vpop.f32.mrf.mxu0
      %v437 = vadd.f32 %v400, %v436
      %438 = vmatmul.f32.gmra.mxu0 %v412
      %v439 = vpop.f32.mrf.mxu0
      %v440 = vadd.f32 %v403, %v439
      %441 = vmatmul.f32.gmra.mxu0 %v414
      %v442 = vpop.f32.mrf.mxu0
      %v443 = vadd.f32 %v406, %v442
      %444 = vdwg.mxu0
      %v445 = vadd.f32 %v343, %v434
      %v446 = vadd.f32 %v344, %v437
      %v447 = vadd.f32 %v345, %v440
      %v448 = vadd.f32 %v346, %v443
      %449 = vst.msk [vmem:[#allocation2] sm:$0xff] %vm338, %v445
      %450 = vst.msk [vmem:[#allocation2 + $0x8] sm:$0xff] %vm338, %v446
      %451 = vst.msk [vmem:[#allocation2 + $0x10] sm:$0xff] %vm338, %v447
      %452 = vst.msk [vmem:[#allocation2 + $0x18] sm:$0xff] %vm338, %v448
      %v453 = vld [vmem:[#allocation2] sm:$0xff]
      %v454 = vld [vmem:[#allocation2 + $0x8] sm:$0xff]
      %v455 = vld [vmem:[#allocation2 + $0x10] sm:$0xff]
      %v456 = vld [vmem:[#allocation2 + $0x18] sm:$0xff]
      %s457 = scalar_lea.vmem %s2, 16
      %v458 = vld [vmem:[%s457] sm:$0xff]
      %s459 = scalar_lea.vmem %s2, 24
      %v460 = vld [vmem:[%s459] sm:$0xff]
      %v469 = vrot.slane %v320, 1
      %v470 = vrot.slane %v321, 1
      %v471 = vsel %vm358, %v469, %v470
      %v472 = vrot.slane %v324, 1
      %v473 = vrot.slane %v325, 1
      %v474 = vsel %vm358, %v472, %v473
      %v475 = vrot.slane %v328, 1
      %v476 = vrot.slane %v329, 1
      %v477 = vsel %vm358, %v475, %v476
      %v478 = vrot.slane %v332, 1
      %v479 = vrot.slane %v333, 1
      %v480 = vsel %vm358, %v478, %v479
      %v481 = vsel %vm338, %v471, 0
      %v483 = vsel %vm338, %v474, 0
      %v485 = vsel %vm338, %v477, 0
      %v487 = vsel %vm338, %v480, 0
      %489 = vmatpush.msra.mxu0 0.0
      %490 = vmatpush.msra.mxu0 0.0
      %491 = vmatpush.msra.mxu0 0.0
      %492 = vmatpush.msra.mxu0 0.0
      %493 = vmatpush.msra.mxu0 0.0
      %494 = vmatpush.msra.mxu0 0.0
      %495 = vmatpush.msra.mxu0 0.0
      %496 = vmatpush.msra.mxu0 0.0
      %497 = vmatpush.msra.mxu0 0.0
      %498 = vmatpush.msra.mxu0 0.0
      %499 = vmatpush.msra.mxu0 0.0
      %500 = vmatpush.msra.mxu0 0.0
      %501 = vmatpush.msra.mxu0 0.0
      %502 = vmatpush.msra.mxu0 0.0
      %503 = vmatpush.msra.mxu0 0.0
      %504 = vmatpush.msra.mxu0 %v460
      %505 = vmatmul.f32.gmra.mxu0 %v481
      %v506 = vpop.f32.mrf.mxu0
      %v507 = vadd.f32 0.0, %v506
      %508 = vmatmul.f32.gmra.mxu0 %v483
      %v509 = vpop.f32.mrf.mxu0
      %v510 = vadd.f32 0.0, %v509
      %511 = vmatmul.f32.gmra.mxu0 %v485
      %v512 = vpop.f32.mrf.mxu0
      %v513 = vadd.f32 0.0, %v512
      %514 = vmatmul.f32.gmra.mxu0 %v487
      %v515 = vpop.f32.mrf.mxu0
      %v516 = vadd.f32 0.0, %v515
      %517 = vdwg.mxu0
      %v518 = vsel %vm338, %v320, 0
      %v520 = vsel %vm338, %v324, 0
      %v522 = vsel %vm338, %v328, 0
      %v524 = vsel %vm338, %v332, 0
      %526 = vmatpush.msra.mxu0 0.0
      %527 = vmatpush.msra.mxu0 0.0
      %528 = vmatpush.msra.mxu0 0.0
      %529 = vmatpush.msra.mxu0 0.0
      %530 = vmatpush.msra.mxu0 0.0
      %531 = vmatpush.msra.mxu0 0.0
      %532 = vmatpush.msra.mxu0 0.0
      %533 = vmatpush.msra.mxu0 0.0
      %534 = vmatpush.msra.mxu0 0.0
      %535 = vmatpush.msra.mxu0 0.0
      %536 = vmatpush.msra.mxu0 0.0
      %537 = vmatpush.msra.mxu0 0.0
      %538 = vmatpush.msra.mxu0 0.0
      %539 = vmatpush.msra.mxu0 0.0
      %540 = vmatpush.msra.mxu0 0.0
      %541 = vmatpush.msra.mxu0 %v458
      %542 = vmatmul.f32.gmra.mxu0 %v518
      %v543 = vpop.f32.mrf.mxu0
      %v544 = vadd.f32 %v507, %v543
      %545 = vmatmul.f32.gmra.mxu0 %v520
      %v546 = vpop.f32.mrf.mxu0
      %v547 = vadd.f32 %v510, %v546
      %548 = vmatmul.f32.gmra.mxu0 %v522
      %v549 = vpop.f32.mrf.mxu0
      %v550 = vadd.f32 %v513, %v549
      %551 = vmatmul.f32.gmra.mxu0 %v524
      %v552 = vpop.f32.mrf.mxu0
      %v553 = vadd.f32 %v516, %v552
      %554 = vdwg.mxu0
      %v555 = vadd.f32 %v453, %v544
      %v556 = vadd.f32 %v454, %v547
      %v557 = vadd.f32 %v455, %v550
      %v558 = vadd.f32 %v456, %v553
      %559 = vst.msk [vmem:[#allocation2] sm:$0xff] %vm338, %v555
      %560 = vst.msk [vmem:[#allocation2 + $0x8] sm:$0xff] %vm338, %v556
      %561 = vst.msk [vmem:[#allocation2 + $0x10] sm:$0xff] %vm338, %v557
      %562 = vst.msk [vmem:[#allocation2 + $0x18] sm:$0xff] %vm338, %v558
      %v563 = vld [vmem:[#allocation2] sm:$0xff]
      %v564 = vld [vmem:[#allocation2 + $0x8] sm:$0xff]
      %v565 = vld [vmem:[#allocation2 + $0x10] sm:$0xff]
      %s566 = scalar_lea.vmem %s2, 32
      %v567 = vld [vmem:[%s566] sm:$0xff]
      %s568 = scalar_lea.vmem %s2, 40
      %v569 = vld [vmem:[%s568] sm:$0xff]
      %570 = vmatpush.msra.mxu0 0.0
      %571 = vmatpush.msra.mxu0 0.0
      %572 = vmatpush.msra.mxu0 0.0
      %573 = vmatpush.msra.mxu0 0.0
      %574 = vmatpush.msra.mxu0 0.0
      %575 = vmatpush.msra.mxu0 0.0
      %576 = vmatpush.msra.mxu0 0.0
      %577 = vmatpush.msra.mxu0 0.0
      %578 = vmatpush.msra.mxu0 0.0
      %579 = vmatpush.msra.mxu0 0.0
      %580 = vmatpush.msra.mxu0 0.0
      %581 = vmatpush.msra.mxu0 0.0
      %582 = vmatpush.msra.mxu0 0.0
      %583 = vmatpush.msra.mxu0 0.0
      %584 = vmatpush.msra.mxu0 0.0
      %585 = vmatpush.msra.mxu0 %v569
      %586 = vmatmul.f32.gmra.mxu0 %v373
      %v587 = vpop.f32.mrf.mxu0
      %v588 = vadd.f32 0.0, %v587
      %589 = vmatmul.f32.gmra.mxu0 %v375
      %v590 = vpop.f32.mrf.mxu0
      %v591 = vadd.f32 0.0, %v590
      %592 = vmatmul.f32.gmra.mxu0 %v377
      %v593 = vpop.f32.mrf.mxu0
      %v594 = vadd.f32 0.0, %v593
      %595 = vdwg.mxu0
      %596 = vmatpush.msra.mxu0 0.0
      %597 = vmatpush.msra.mxu0 0.0
      %598 = vmatpush.msra.mxu0 0.0
      %599 = vmatpush.msra.mxu0 0.0
      %600 = vmatpush.msra.mxu0 0.0
      %601 = vmatpush.msra.mxu0 0.0
      %602 = vmatpush.msra.mxu0 0.0
      %603 = vmatpush.msra.mxu0 0.0
      %604 = vmatpush.msra.mxu0 0.0
      %605 = vmatpush.msra.mxu0 0.0
      %606 = vmatpush.msra.mxu0 0.0
      %607 = vmatpush.msra.mxu0 0.0
      %608 = vmatpush.msra.mxu0 0.0
      %609 = vmatpush.msra.mxu0 0.0
      %610 = vmatpush.msra.mxu0 0.0
      %611 = vmatpush.msra.mxu0 %v567
      %612 = vmatmul.f32.gmra.mxu0 %v410
      %v613 = vpop.f32.mrf.mxu0
      %v614 = vadd.f32 %v588, %v613
      %615 = vmatmul.f32.gmra.mxu0 %v412
      %v616 = vpop.f32.mrf.mxu0
      %v617 = vadd.f32 %v591, %v616
      %618 = vmatmul.f32.gmra.mxu0 %v414
      %v619 = vpop.f32.mrf.mxu0
      %v620 = vadd.f32 %v594, %v619
      %621 = vdwg.mxu0
      %v622 = vadd.f32 %v563, %v614
      %v623 = vadd.f32 %v564, %v617
      %v624 = vadd.f32 %v565, %v620
      %625 = vst.msk [vmem:[#allocation2] sm:$0xff] %vm338, %v622
      %626 = vst.msk [vmem:[#allocation2 + $0x8] sm:$0xff] %vm338, %v623
      %627 = vst.msk [vmem:[#allocation2 + $0x10] sm:$0xff] %vm338, %v624
      %v628 = vld [vmem:[#allocation2 + $0x18] sm:$0xff]
      %v629 = vld [vmem:[%s305] sm:$0xff]
      %v630 = vld [vmem:[%s305 + $0x8] sm:$0x1]
      %v631 = vld [vmem:[%s566] sm:$0xff]
      %v632 = vld [vmem:[%s568] sm:$0xff]
      %v635 = vrot.slane %v629, 1
      %v636 = vrot.slane %v630, 1
      %v637 = vsel %vm358, %v635, %v636
      %v638 = vsel %vm338, %v637, 0
      %640 = vmatpush.msra.mxu0 0.0
      %641 = vmatpush.msra.mxu0 0.0
      %642 = vmatpush.msra.mxu0 0.0
      %643 = vmatpush.msra.mxu0 0.0
      %644 = vmatpush.msra.mxu0 0.0
      %645 = vmatpush.msra.mxu0 0.0
      %646 = vmatpush.msra.mxu0 0.0
      %647 = vmatpush.msra.mxu0 0.0
      %648 = vmatpush.msra.mxu0 0.0
      %649 = vmatpush.msra.mxu0 0.0
      %650 = vmatpush.msra.mxu0 0.0
      %651 = vmatpush.msra.mxu0 0.0
      %652 = vmatpush.msra.mxu0 0.0
      %653 = vmatpush.msra.mxu0 0.0
      %654 = vmatpush.msra.mxu0 0.0
      %655 = vmatpush.msra.mxu0 %v632
      %656 = vmatmul.f32.gmra.mxu0 %v638
      %v657 = vpop.f32.mrf.mxu0
      %v658 = vadd.f32 0.0, %v657
      %659 = vdwg.mxu0
      %v660 = vsel %vm338, %v629, 0
      %662 = vmatpush.msra.mxu0 0.0
      %663 = vmatpush.msra.mxu0 0.0
      %664 = vmatpush.msra.mxu0 0.0
      %665 = vmatpush.msra.mxu0 0.0
      %666 = vmatpush.msra.mxu0 0.0
      %667 = vmatpush.msra.mxu0 0.0
      %668 = vmatpush.msra.mxu0 0.0
      %669 = vmatpush.msra.mxu0 0.0
      %670 = vmatpush.msra.mxu0 0.0
      %671 = vmatpush.msra.mxu0 0.0
      %672 = vmatpush.msra.mxu0 0.0
      %673 = vmatpush.msra.mxu0 0.0
      %674 = vmatpush.msra.mxu0 0.0
      %675 = vmatpush.msra.mxu0 0.0
      %676 = vmatpush.msra.mxu0 0.0
      %677 = vmatpush.msra.mxu0 %v631
      %678 = vmatmul.f32.gmra.mxu0 %v660
      %v679 = vpop.f32.mrf.mxu0
      %v680 = vadd.f32 %v658, %v679
      %681 = vdwg.mxu0
      %v682 = vadd.f32 %v628, %v680
      %683 = vst.msk [vmem:[#allocation2 + $0x18] sm:$0xff] %vm338, %v682
      %v684 = vld [vmem:[#allocation2] sm:$0xff]
      %v685 = vld [vmem:[#allocation2 + $0x8] sm:$0xff]
      %v686 = vld [vmem:[#allocation2 + $0x10] sm:$0xff]
      %v687 = vld [vmem:[#allocation2 + $0x18] sm:$0xff]
      %688 = vst.msk [vmem:[%s316] sm:$0xff] %vm338, %v684
      %689 = vst.msk [vmem:[%s316 + $0x8] sm:$0xff] %vm338, %v685
      %690 = vst.msk [vmem:[%s316 + $0x10] sm:$0xff] %vm338, %v686
      %691 = vst.msk [vmem:[%s316 + $0x18] sm:$0xff] %vm338, %v687
      %s692 = smul.u32 4, %s20
      %p693 = scmp.lt.s32.totalorder %s19, 1
      %s694 = scalar_select %p693, %s19, 1
      %p695 = scmp.lt.s32.totalorder %s692, 7
      %s696 = scalar_select %p695, %s692, 7
      %s697 = smul.addr %s694, 8
      %s698 = sadd.s32 %s696, %s697
      %s699 = smul.addr %s698, 8
      %s700 = scalar_lea.vmem %s4, %s699
      // Predicated region
      $region37: #{downsample_conv2d.1} parent=35 // pred_check
        %p701 = pneg %p149
      $region38: #{downsample_conv2d.1} parent=35 // pred_check_branch
        %703 = sbr.rel (%p701) target = $region40
      $region39: #{downsample_conv2d.1} parent=35 // pred_region
        %s704 = smul.u32 4, %s20
      $region40: #{downsample_conv2d.1} parent=35 // pred_fallthru
        _
    $region36: #{downsample_conv2d.1} parent=5 // pred_fallthru
      _
    %p705 = scmp.le.s32.totalorder 2, %s10
    // Predicated region
    $region41: #{downsample_conv2d.1} parent=5 // pred_check
      %p706 = pneg %p705
    $region42: #{downsample_conv2d.1} parent=5 // pred_check_branch
      %708 = sbr.rel (%p706) target = $region44
    $region43: #{downsample_conv2d.1} parent=5 // pred_region
      %s709 = ssub.s32 %s10, 2
      // Predicated region
      $region45: #{downsample_conv2d.1} parent=43 // pred_check
        %p710 = pneg %p155
      $region46: #{downsample_conv2d.1} parent=43 // pred_check_branch
        %712 = sbr.rel (%p710) target = $region48
      $region47: #{downsample_conv2d.1} parent=43 // pred_region
        %s713 = smul.u32 4, %s22
        %p714 = scmp.lt.s32.totalorder %s21, 1
        %s715 = scalar_select %p714, %s21, 1
        %p716 = scmp.lt.s32.totalorder %s713, 7
        %s717 = scalar_select %p716, %s713, 7
        %s718 = smul.addr %s715, 8
        %s719 = sadd.s32 %s717, %s718
        %s720 = smul.addr %s719, 8
        %s721 = scalar_lea.vmem %s4, %s720
      $region48: #{downsample_conv2d.1} parent=43 // pred_fallthru
        _
    $region44: #{downsample_conv2d.1} parent=5 // pred_fallthru
      _
  $region6: #{downsample_conv2d.1} parent=0 // loop_footer
    %s14 = sadd.s32 1, %s10
  $region7: #{downsample_conv2d.1} parent=0 // loop_footer_branch
    %9 = sbr.rel target = $region3
  $region8: #{downsample_conv2d.1} parent=0 // loop_exit
    _

</llo_original>
